<compile_context>
chip_gen: v7x
topology: tpu7x:2x2x1
jax: 0.10.0
libtpu: 0.0.40
codegen_flags: <defaults>
</compile_context>

<pallas_src>
import jax
import jax.numpy as jnp
from jax.experimental import pallas as pl
from jax.experimental.pallas import tpu as pltpu

LANE = 128  # TPU lane width; only the hidden dim is padded to this.


def _round_up(n: int, m: int) -> int:
    return ((n + m - 1) // m) * m


def actionnn_kernel(x_ref, w1_ref, b1_ref, w2_ref, b2_ref, o_ref):
    """One batch tile: (TB, ni) -> fc1 -> ReLU -> fc2 -> (TB, no)."""
    x = x_ref[...].astype(jnp.bfloat16)                # in-kernel cast, no HBM copy
    # fc1 + ReLU (MXU matmul, f32 accumulation; bias add + relu on the VPU)
    h = jnp.dot(x, w1_ref[...], preferred_element_type=jnp.float32) + b1_ref[...]
    h = jnp.maximum(h, 0.0).astype(jnp.bfloat16)       # lane-dense (TB, nh_p) hidden
    # fc2 (padded hidden columns are exactly zero -> contribute nothing)
    out = jnp.dot(h, w2_ref[...], preferred_element_type=jnp.float32) + b2_ref[...]
    o_ref[...] = out.astype(o_ref.dtype)               # narrow (TB, no) f32 store


def prepare_params(w1, b1, w2, b2):
    """One-time glue: transpose to row-major matmul layout, zero-pad only the
    hidden dim to 128 lanes, cast weights to bf16. Keep the result persistent."""
    nh, ni = w1.shape
    no = w2.shape[0]
    nh_p = _round_up(nh, LANE)

    w1_t = jnp.zeros((ni, nh_p), jnp.bfloat16).at[:, :nh].set(w1.T.astype(jnp.bfloat16))
    b1_p = jnp.zeros((1, nh_p), jnp.float32).at[:, :nh].set(b1.astype(jnp.float32))
    w2_t = jnp.zeros((nh_p, no), jnp.bfloat16).at[:nh, :].set(w2.T.astype(jnp.bfloat16))
    b2_p = b2.astype(jnp.float32).reshape(1, no)
    return {"w1_t": w1_t, "b1": b1_p, "w2_t": w2_t, "b2": b2_p,
            "ni": ni, "nh": nh, "no": no}


def actionnn_forward(x, params, *, tb=1024):
    """x: (B, ni) f32. Returns (B, no) f32.

    tb: max batch-tile rows. At tb=1024 the per-step working set is ~64 KiB
    x-tile + ~16 KiB out-tile (double-buffered) plus ~100 KiB resident
    weights -- well under the 32 MiB scoped-VMEM default on v5e, v6e and v7x,
    so no vmem_limit_bytes bump is required on any generation.
    """
    w1_t, b1_p, w2_t, b2_p = params["w1_t"], params["b1"], params["w2_t"], params["b2"]
    ni, no = params["ni"], params["no"]
    nh_p = w1_t.shape[1]

    B = x.shape[0]
    assert x.shape[1] == ni

    if B <= 64:
        # Tiny / inference batch: one full-array tile (block == full dims is
        # always legal), zero padded rows, zero wasted work.
        tb_eff, b_pad = B, B
    else:
        # At least 2 grid steps so the "parallel" batch axis can be split
        # across both v7x TensorCores; cap at tb; keep a multiple of 8 rows.
        tb_eff = min(tb, _round_up(pl.cdiv(B, 2), 8))
        b_pad = _round_up(B, tb_eff)

    x_in = x if b_pad == B else jnp.pad(x, ((0, b_pad - B), (0, 0)))

    grid = (b_pad // tb_eff,)

    bytes_accessed = (b_pad * ni * 4 + b_pad * no * 4
                      + w1_t.size * 2 + w2_t.size * 2
                      + b1_p.size * 4 + b2_p.size * 4)
    cost = pl.CostEstimate(
        flops=2 * b_pad * (ni * nh_p + nh_p * no),
        transcendentals=0,
        bytes_accessed=bytes_accessed)

    out = pl.pallas_call(
        actionnn_kernel,
        out_shape=jax.ShapeDtypeStruct((b_pad, no), jnp.float32),
        grid=grid,
        in_specs=[
            # x tile marches down the batch; weights/biases stay VMEM-resident.
            pl.BlockSpec((tb_eff, ni), lambda i: (i, 0), memory_space=pltpu.VMEM),
            pl.BlockSpec((ni, nh_p), lambda i: (0, 0), memory_space=pltpu.VMEM),
            pl.BlockSpec((1, nh_p), lambda i: (0, 0), memory_space=pltpu.VMEM),
            pl.BlockSpec((nh_p, no), lambda i: (0, 0), memory_space=pltpu.VMEM),
            pl.BlockSpec((1, no), lambda i: (0, 0), memory_space=pltpu.VMEM),
        ],
        out_specs=pl.BlockSpec((tb_eff, no), lambda i: (i, 0),
                               memory_space=pltpu.VMEM),
        compiler_params=pltpu.CompilerParams(
            dimension_semantics=("parallel",)),   # shard batch tiles across TCs (v7x)
        cost_estimate=cost,
    )(x_in, w1_t, b1_p, w2_t, b2_p)

    return out if b_pad == B else out[:B]


def init_params(key, ni, nh, no):
    """PyTorch nn.Linear default init: U[-1/sqrt(fan_in), 1/sqrt(fan_in)]."""
    k1, k2, k3, k4 = jax.random.split(key, 4)
    bound1 = 1.0 / jnp.sqrt(ni)
    bound2 = 1.0 / jnp.sqrt(nh)
    w1 = jax.random.uniform(k1, (nh, ni), jnp.float32, -bound1, bound1)
    b1 = jax.random.uniform(k2, (nh,), jnp.float32, -bound1, bound1)
    w2 = jax.random.uniform(k3, (no, nh), jnp.float32, -bound2, bound2)
    b2 = jax.random.uniform(k4, (no,), jnp.float32, -bound2, bound2)
    return w1, b1, w2, b2


if __name__ == "__main__":
    key = jax.random.PRNGKey(0)
    kx, kp = jax.random.split(key)

    # Small shapes consistent with ActionNN(ni=16, no=4, nh=10).
    B, ni, nh, no = 2, 16, 10, 4
    x = jax.random.normal(kx, (B, ni), jnp.float32)
    w1, b1, w2, b2 = init_params(kp, ni, nh, no)

    # One-time parameter prep (transpose + hidden-dim pad + bf16 cast).
    params = prepare_params(w1, b1, w2, b2)

    # Tiny-batch path (single full-array tile, no padding).
    out = jax.block_until_ready(actionnn_forward(x, params))
    ref = jnp.maximum(x @ w1.T + b1, 0.0) @ w2.T + b2
    assert out.shape == (B, no)
    assert jnp.allclose(out, ref, atol=5e-2, rtol=5e-2), (out, ref)

    # Also exercise the tiled path (>=2 grid steps + batch row padding).
    B2 = 100
    x2 = jax.random.normal(kx, (B2, ni), jnp.float32)
    out2 = jax.block_until_ready(actionnn_forward(x2, params))
    ref2 = jnp.maximum(x2 @ w1.T + b1, 0.0) @ w2.T + b2
    assert out2.shape == (B2, no)
    assert jnp.allclose(out2, ref2, atol=5e-2, rtol=5e-2)

    print("KERNEL_OK")
</pallas_src>

<mosaic_0001>
module attributes {stable_mosaic.version = 11 : i64} {
  func.func @actionnn_kernel(%arg0: i32, %arg1: memref<2x16xf32, #tpu.memory_space<vmem>>, %arg2: memref<16x128xbf16, #tpu.memory_space<vmem>>, %arg3: memref<1x128xf32, #tpu.memory_space<vmem>>, %arg4: memref<128x4xbf16, #tpu.memory_space<vmem>>, %arg5: memref<1x4xf32, #tpu.memory_space<vmem>>, %arg6: memref<2x4xf32, #tpu.memory_space<vmem>>) attributes {dimension_semantics = [#tpu.dimension_semantics<parallel>], iteration_bounds = array<i64: 1>, scalar_prefetch = 0 : i64, scratch_operands = 0 : i64, tpu.core_type = #tpu.core_type<tc>, window_params = [{transform_indices = @transform_0, window_bounds = array<i64: 2, 16>}, {pipeline_mode = #tpu.pipeline_mode<synchronous>, transform_indices = @transform_1, window_bounds = array<i64: 16, 128>}, {pipeline_mode = #tpu.pipeline_mode<synchronous>, transform_indices = @transform_2, window_bounds = array<i64: 1, 128>}, {pipeline_mode = #tpu.pipeline_mode<synchronous>, transform_indices = @transform_3, window_bounds = array<i64: 128, 4>}, {pipeline_mode = #tpu.pipeline_mode<synchronous>, transform_indices = @transform_4, window_bounds = array<i64: 1, 4>}, {transform_indices = @transform_5, window_bounds = array<i64: 2, 4>}]} {
    %c0 = arith.constant 0 : index
    %c0_0 = arith.constant 0 : index
    %0 = vector.load %arg1[%c0, %c0_0] : memref<2x16xf32, #tpu.memory_space<vmem>>, vector<2x16xf32>
    %1 = arith.truncf %0 : vector<2x16xf32> to vector<2x16xbf16>
    %c0_1 = arith.constant 0 : index
    %c0_2 = arith.constant 0 : index
    %2 = vector.load %arg2[%c0_1, %c0_2] : memref<16x128xbf16, #tpu.memory_space<vmem>>, vector<16x128xbf16>
    %cst = arith.constant dense<0.000000e+00> : vector<2x128xf32>
    %3 = tpu.matmul %1, %2, %cst {dimension_numbers = #tpu.dot_dimension_numbers<[1], [0], [0], [1], [0, 0, 1, 1], [], []>} : vector<2x16xbf16>, vector<16x128xbf16>, vector<2x128xf32> -> vector<2x128xf32>
    %c0_3 = arith.constant 0 : index
    %c0_4 = arith.constant 0 : index
    %4 = vector.load %arg3[%c0_3, %c0_4] : memref<1x128xf32, #tpu.memory_space<vmem>>, vector<1x128xf32>
    %5 = vector.broadcast %4 : vector<1x128xf32> to vector<2x128xf32>
    %6 = arith.addf %3, %5 : vector<2x128xf32>
    %cst_5 = arith.constant 0.000000e+00 : f32
    %7 = vector.broadcast %cst_5 : f32 to vector<2x128xf32>
    %8 = arith.maximumf %6, %7 : vector<2x128xf32>
    %9 = arith.truncf %8 : vector<2x128xf32> to vector<2x128xbf16>
    %c0_6 = arith.constant 0 : index
    %c0_7 = arith.constant 0 : index
    %10 = vector.load %arg4[%c0_6, %c0_7] : memref<128x4xbf16, #tpu.memory_space<vmem>>, vector<128x4xbf16>
    %cst_8 = arith.constant dense<0.000000e+00> : vector<2x4xf32>
    %11 = tpu.matmul %9, %10, %cst_8 {dimension_numbers = #tpu.dot_dimension_numbers<[1], [0], [0], [1], [0, 0, 1, 1], [], []>} : vector<2x128xbf16>, vector<128x4xbf16>, vector<2x4xf32> -> vector<2x4xf32>
    %c0_9 = arith.constant 0 : index
    %c0_10 = arith.constant 0 : index
    %12 = vector.load %arg5[%c0_9, %c0_10] : memref<1x4xf32, #tpu.memory_space<vmem>>, vector<1x4xf32>
    %13 = vector.broadcast %12 : vector<1x4xf32> to vector<2x4xf32>
    %14 = arith.addf %11, %13 : vector<2x4xf32>
    %c0_11 = arith.constant 0 : index
    %c0_12 = arith.constant 0 : index
    %15 = vector.load %arg6[%c0_11, %c0_12] : memref<2x4xf32, #tpu.memory_space<vmem>>, vector<2x4xf32>
    tpu.vector_store %arg6[%c0_11, %c0_12], %14 {strides = array<i32>} : memref<2x4xf32, #tpu.memory_space<vmem>>, vector<2x4xf32>,
    return
  }
  func.func @transform_0(%arg0: i32) -> (i32, i32) {
    %c0_i32 = arith.constant 0 : i32
    %c0_i32_0 = arith.constant 0 : i32
    return %arg0, %c0_i32 : i32, i32
  }
  func.func @transform_1(%arg0: i32) -> (i32, i32) {
    %c0_i32 = arith.constant 0 : i32
    %c0_i32_0 = arith.constant 0 : i32
    %c0_i32_1 = arith.constant 0 : i32
    return %c0_i32, %c0_i32_0 : i32, i32
  }
  func.func @transform_2(%arg0: i32) -> (i32, i32) {
    %c0_i32 = arith.constant 0 : i32
    %c0_i32_0 = arith.constant 0 : i32
    %c0_i32_1 = arith.constant 0 : i32
    return %c0_i32, %c0_i32_0 : i32, i32
  }
  func.func @transform_3(%arg0: i32) -> (i32, i32) {
    %c0_i32 = arith.constant 0 : i32
    %c0_i32_0 = arith.constant 0 : i32
    %c0_i32_1 = arith.constant 0 : i32
    return %c0_i32, %c0_i32_0 : i32, i32
  }
  func.func @transform_4(%arg0: i32) -> (i32, i32) {
    %c0_i32 = arith.constant 0 : i32
    %c0_i32_0 = arith.constant 0 : i32
    %c0_i32_1 = arith.constant 0 : i32
    return %c0_i32, %c0_i32_0 : i32, i32
  }
  func.func @transform_5(%arg0: i32) -> (i32, i32) {
    %c0_i32 = arith.constant 0 : i32
    %c0_i32_0 = arith.constant 0 : i32
    return %arg0, %c0_i32 : i32, i32
  }
}

</mosaic_0001>

<llo_original>
// kernel: tpu_custom_call.1
$region0: #{tpu_custom_call.1}
  #allocation0 [shape = 'u32[]', space=smem, size = 0x4, offset = 0x4, fixed_abs, tag = 'smem constant byte address 0x4 - core index']
  #allocation1 [shape = 'u32[144,128]{1,0:T(1,128)}', space=vmem, size = 0x12000, scoped, tag = 'internal scratch']
  %s0 = inlined_call_operand.vmem [shape: f32[2,16], index: 0, kind: input, shape index: {}]
  %s1 = inlined_call_operand.vmem [shape: bf16[16,128], index: 1, kind: input, shape index: {}]
  %s2 = inlined_call_operand.vmem [shape: f32[1,128], index: 2, kind: input, shape index: {}]
  %s3 = inlined_call_operand.vmem [shape: bf16[128,4], index: 3, kind: input, shape index: {}]
  %s4 = inlined_call_operand.vmem [shape: f32[1,4], index: 4, kind: input, shape index: {}]
  %s5 = inlined_call_operand.hbm [shape: f32[2,4], index: 5, kind: output, shape index: {}]
  %s6 = sld [smem:[#allocation0]]
  $region30: #{tpu_custom_call.1} parent=0
    _
  %s8 = ssub.s32 1, %s6
  %s9 = scalar_select 0, %s8, %s6
  $region1: #{tpu_custom_call.1} parent=0
    #allocation2 [shape = 'u8[1024]{0}', space=vmem, size = 0x400, scoped, tag = 'output window, operand 0, single buffered']
    #allocation3 [shape = 's32[1]{0}', space=sflag, size = 0x4, scoped, tag = 'scoped memory for tpu_custom_call.1']
    %10 = vsyncpa [#allocation3], 0
    // Predicated region
    $region2: #{tpu_custom_call.1} parent=1 // pred_check
      _
    $region3: #{tpu_custom_call.1} parent=1 // pred_check_branch
      %12 = sbr.rel (0) target = $region5
    $region4: #{tpu_custom_call.1} parent=1 // pred_region
      _
    $region5: #{tpu_custom_call.1} parent=1 // pred_fallthru
      _
    // Predicated region
    $region6: #{tpu_custom_call.1} parent=1 // pred_check
      _
    $region7: #{tpu_custom_call.1} parent=1 // pred_check_branch
      %14 = sbr.rel (0) target = $region9
    $region8: #{tpu_custom_call.1} parent=1 // pred_region
      _
    $region9: #{tpu_custom_call.1} parent=1 // pred_fallthru
      _
    // Predicated region
    $region10: #{tpu_custom_call.1} parent=1 // pred_check
      _
    $region11: #{tpu_custom_call.1} parent=1 // pred_check_branch
      %16 = sbr.rel (0) target = $region13
    $region12: #{tpu_custom_call.1} parent=1 // pred_region
      _
    $region13: #{tpu_custom_call.1} parent=1 // pred_fallthru
      _
    // Predicated region
    $region14: #{tpu_custom_call.1} parent=1 // pred_check
      _
    $region15: #{tpu_custom_call.1} parent=1 // pred_check_branch
      %18 = sbr.rel (0) target = $region17
    $region16: #{tpu_custom_call.1} parent=1 // pred_region
      _
    $region17: #{tpu_custom_call.1} parent=1 // pred_fallthru
      _
    // Predicated region
    $region18: #{tpu_custom_call.1} parent=1 // pred_check
      _
    $region19: #{tpu_custom_call.1} parent=1 // pred_check_branch
      %20 = sbr.rel (0) target = $region21
    $region20: #{tpu_custom_call.1} parent=1 // pred_region
      _
    $region21: #{tpu_custom_call.1} parent=1 // pred_fallthru
      _
    %v22 = vld [vmem:[%s0] sm:$0x3]
    %v23 = vpack.c.bf16 %v22, %v22
    %v24 = vld [vmem:[%s1] sm:$0xf]
    %v25 = vld [vmem:[%s1 + $0x4] sm:$0xf]
    %v26 = vld [vmem:[%s2] sm:$0x1]
    %v28 = vlaneseq
    %v29 = vshrl.u32 %v28, 7
    %v30 = vsub.s32 0, %v29
    %v31 = vrot.slane %v26, %v30
    %v35 = vunpack.c.l.b16 %v24
    %v36 = vunpack.c.l.b16 %v25
    %v37 = vpack.c.b16 %v36, %v35
    %vm39 = vcmask 130048
    %v41 = vsel %vm39, %v23, 0
    %43 = vmatprep.subr.bf16.mxu0 0
    %44 = vmatpush1.bf16.msra.mxu0 %v37
    %45 = vmatprep.subr.bf16.mxu0 0
    %46 = vmatpush1.bf16.msra.mxu0 0
    %47 = vmatprep.subr.bf16.mxu0 0
    %48 = vmatpush1.bf16.msra.mxu0 0
    %49 = vmatprep.subr.bf16.mxu0 0
    %50 = vmatpush1.bf16.msra.mxu0 0
    %51 = vmatprep.subr.bf16.mxu0 0
    %52 = vmatpush1.bf16.msra.mxu0 0
    %53 = vmatprep.subr.bf16.mxu0 0
    %54 = vmatpush1.bf16.msra.mxu0 0
    %55 = vmatprep.subr.bf16.mxu0 0
    %56 = vmatpush1.bf16.msra.mxu0 0
    %57 = vmatprep.subr.bf16.mxu0 0
    %58 = vmatpush1.bf16.msra.mxu0 0
    %59 = vmatprep.subr.bf16.mxu0 0
    %60 = vmatpush1.bf16.msra.mxu0 0
    %61 = vmatprep.subr.bf16.mxu0 0
    %62 = vmatpush1.bf16.msra.mxu0 0
    %63 = vmatprep.subr.bf16.mxu0 0
    %64 = vmatpush1.bf16.msra.mxu0 0
    %65 = vmatprep.subr.bf16.mxu0 0
    %66 = vmatpush1.bf16.msra.mxu0 0
    %67 = vmatprep.subr.bf16.mxu0 0
    %68 = vmatpush1.bf16.msra.mxu0 0
    %69 = vmatprep.subr.bf16.mxu0 0
    %70 = vmatpush1.bf16.msra.mxu0 0
    %71 = vmatprep.subr.bf16.mxu0 0
    %72 = vmatpush1.bf16.msra.mxu0 0
    %73 = vmatprep.subr.bf16.mxu0 0
    %74 = vmatpush1.bf16.msra.mxu0 0
    %75 = vmatprep.mubr.bf16.mxu0 0
    %76 = vmatmul.mubr.bf16.gmra.mrb[0].mxu0 %v41
    %v77 = vpop.f32.mrb[0].mxu0
    %v78 = vadd.f32 %v31, %v77
    %v79 = vpop.f32.mrb[0].mxu0
    %v80 = vpop.f32.mrb[0].mxu0
    %v81 = vpop.f32.mrb[0].mxu0
    %82 = vdwg.mxu0
    %v83 = vmax.f32 %v78, 0.0
    %v84 = vpack.c.bf16 %v83, %v83
    %v85 = vld [vmem:[%s3] sm:$0xf]
    %v86 = vld [vmem:[%s3 + $0x4] sm:$0xf]
    %v87 = vld [vmem:[%s3 + $0x8] sm:$0xf]
    %v88 = vld [vmem:[%s3 + $0xc] sm:$0xf]
    %v89 = vld [vmem:[%s3 + $0x10] sm:$0xf]
    %v90 = vld [vmem:[%s3 + $0x14] sm:$0xf]
    %v91 = vld [vmem:[%s3 + $0x18] sm:$0xf]
    %v92 = vld [vmem:[%s3 + $0x1c] sm:$0xf]
    %v93 = vld [vmem:[%s3 + $0x20] sm:$0xf]
    %v94 = vld [vmem:[%s3 + $0x24] sm:$0xf]
    %v95 = vld [vmem:[%s3 + $0x28] sm:$0xf]
    %v96 = vld [vmem:[%s3 + $0x2c] sm:$0xf]
    %v97 = vld [vmem:[%s3 + $0x30] sm:$0xf]
    %v98 = vld [vmem:[%s3 + $0x34] sm:$0xf]
    %v99 = vld [vmem:[%s3 + $0x38] sm:$0xf]
    %v100 = vld [vmem:[%s3 + $0x3c] sm:$0xf]
    %v101 = vld [vmem:[%s4] sm:$0x1]
    %v103 = vlaneseq
    %v104 = vshrl.u32 %v103, 7
    %v105 = vsub.s32 0, %v104
    %v106 = vrot.slane %v101, %v105
    %v124 = vunpack.c.l.b16 %v85
    %v125 = vunpack.c.l.b16 %v86
    %v126 = vunpack.c.l.b16 %v87
    %v127 = vunpack.c.l.b16 %v88
    %v128 = vunpack.c.l.b16 %v89
    %v129 = vunpack.c.l.b16 %v90
    %v130 = vunpack.c.l.b16 %v91
    %v131 = vunpack.c.l.b16 %v92
    %v132 = vunpack.c.l.b16 %v93
    %v133 = vunpack.c.l.b16 %v94
    %v134 = vunpack.c.l.b16 %v95
    %v135 = vunpack.c.l.b16 %v96
    %v136 = vunpack.c.l.b16 %v97
    %v137 = vunpack.c.l.b16 %v98
    %v138 = vunpack.c.l.b16 %v99
    %v139 = vunpack.c.l.b16 %v100
    %v140 = vpack.c.b16 %v125, %v124
    %v141 = vpack.c.b16 %v127, %v126
    %v142 = vpack.c.b16 %v129, %v128
    %v143 = vpack.c.b16 %v131, %v130
    %v144 = vpack.c.b16 %v133, %v132
    %v145 = vpack.c.b16 %v135, %v134
    %v146 = vpack.c.b16 %v137, %v136
    %v147 = vpack.c.b16 %v139, %v138
    %156 = vmatprep.subr.bf16.mxu0 0
    %157 = vmatpush1.bf16.msra.mxu0 %v140
    %158 = vmatprep.subr.bf16.mxu0 0
    %159 = vmatpush1.bf16.msra.mxu0 %v141
    %160 = vmatprep.subr.bf16.mxu0 0
    %161 = vmatpush1.bf16.msra.mxu0 %v142
    %162 = vmatprep.subr.bf16.mxu0 0
    %163 = vmatpush1.bf16.msra.mxu0 %v143
    %164 = vmatprep.subr.bf16.mxu0 0
    %165 = vmatpush1.bf16.msra.mxu0 %v144
    %166 = vmatprep.subr.bf16.mxu0 0
    %167 = vmatpush1.bf16.msra.mxu0 %v145
    %168 = vmatprep.subr.bf16.mxu0 0
    %169 = vmatpush1.bf16.msra.mxu0 %v146
    %170 = vmatprep.subr.bf16.mxu0 0
    %171 = vmatpush1.bf16.msra.mxu0 %v147
    %172 = vmatprep.subr.bf16.mxu0 0
    %173 = vmatpush1.bf16.msra.mxu0 0
    %174 = vmatprep.subr.bf16.mxu0 0
    %175 = vmatpush1.bf16.msra.mxu0 0
    %176 = vmatprep.subr.bf16.mxu0 0
    %177 = vmatpush1.bf16.msra.mxu0 0
    %178 = vmatprep.subr.bf16.mxu0 0
    %179 = vmatpush1.bf16.msra.mxu0 0
    %180 = vmatprep.subr.bf16.mxu0 0
    %181 = vmatpush1.bf16.msra.mxu0 0
    %182 = vmatprep.subr.bf16.mxu0 0
    %183 = vmatpush1.bf16.msra.mxu0 0
    %184 = vmatprep.subr.bf16.mxu0 0
    %185 = vmatpush1.bf16.msra.mxu0 0
    %186 = vmatprep.subr.bf16.mxu0 0
    %187 = vmatpush1.bf16.msra.mxu0 0
    %188 = vmatprep.mubr.bf16.mxu0 0
    %189 = vmatmul.mubr.bf16.gmra.mrb[0].mxu0 %v84
    %v190 = vpop.f32.mrb[0].mxu0
    %v191 = vadd.f32 %v106, %v190
    %v192 = vpop.f32.mrb[0].mxu0
    %v193 = vpop.f32.mrb[0].mxu0
    %v194 = vpop.f32.mrb[0].mxu0
    %195 = vdwg.mxu0
    %vm196 = vcmask 25600
    %197 = vst.msk [vmem:[#allocation2] sm:$0x3] %vm196, %v191
    // Predicated region
    $region22: #{tpu_custom_call.1} parent=1 // pred_check
      _
    $region23: #{tpu_custom_call.1} parent=1 // pred_check_branch
      %199 = sbr.rel (0) target = $region25
    $region24: #{tpu_custom_call.1} parent=1 // pred_region
      %s201 = ssub.s32 32, 32
      %202 = vsyncadd [#allocation3], %s201
      %s204 = sshll.u32 [#allocation2], 4
      %s205 = int_to_ptr.vmem [resolvable:$true] %s204
      %207 = dma.vmem_to_hbm [thread:$0]  %s205, 32, %s5, [#allocation3]
    $region25: #{tpu_custom_call.1} parent=1 // pred_fallthru
      _
    // Predicated region
    $region26: #{tpu_custom_call.1} parent=1 // pred_check
      _
    $region27: #{tpu_custom_call.1} parent=1 // pred_check_branch
      %209 = sbr.rel (0) target = $region29
    $region28: #{tpu_custom_call.1} parent=1 // pred_region
      %210 = dma.done [#allocation3], 32
    $region29: #{tpu_custom_call.1} parent=1 // pred_fallthru
      _
    %211 = vsyncpa [#allocation3], 1

</llo_original>
